<compile_context>
chip_gen: v7x
topology: tpu7x:2x2x1
jax: 0.10.0
libtpu: 0.0.40
codegen_flags: <defaults>
</compile_context>

<pallas_src>
import jax
import jax.numpy as jnp
from jax.experimental import pallas as pl
from jax.experimental.pallas import tpu as pltpu

EPS = 1e-5
POOL = 64  # VarMaxPool1D kernel & stride


def _ssa_kernel(x_ref, p_ref, abg_ref, out_ref, gate_ref):
    x = x_ref[0]                          # (C, T)
    P = p_ref[...]                        # (T, npool), 1/POOL per window column
    alpha = abg_ref[:, 0:1]               # (C, 1)
    gamma = abg_ref[:, 1:2]
    beta = abg_ref[:, 2:3]

    # ---- VarMaxPool1D(kernel=64, stride=64) as MXU matmuls ----
    m = jnp.dot(x, P, preferred_element_type=jnp.float32)        # E[x]   per window
    ms = jnp.dot(x * x, P, preferred_element_type=jnp.float32)   # E[x^2] per window
    var = ms - m * m                                             # (C, npool), f32
    gp = jnp.mean(var, axis=1, keepdims=True)                    # avg_pool over windows

    # ---- SSA gate (mode='var') ----
    emb = jnp.sqrt(gp + EPS) * alpha                             # (C, 1)
    norm = gamma * jax.lax.rsqrt(
        jnp.mean(emb * emb, axis=0, keepdims=True) + EPS)
    gate = 1.0 + jnp.tanh(emb * norm + beta)                     # (C, 1)

    gate_ref[0] = gate.astype(gate_ref.dtype)
    out_ref[0] = (x * gate).astype(out_ref.dtype)                # lane-dense store


def ssa_pallas(x, alpha, gamma, beta):
    """SSA.forward for mode='var'. Returns (x * gate, gate)."""
    B, C, T = x.shape
    npool = (T - POOL) // POOL + 1

    # Averaging matrix: column w has 1/POOL on rows [w*POOL, (w+1)*POOL).
    t = jnp.arange(T)[:, None]
    w = jnp.arange(npool)[None, :]
    P = jnp.where((t >= w * POOL) & (t < (w + 1) * POOL),
                  1.0 / POOL, 0.0).astype(jnp.float32)            # (T, npool)

    abg = jnp.concatenate(
        [alpha.reshape(C, 1), gamma.reshape(C, 1), beta.reshape(C, 1)],
        axis=1).astype(jnp.float32)                               # (C, 3)

    out, gate = pl.pallas_call(
        _ssa_kernel,
        out_shape=(jax.ShapeDtypeStruct((B, C, T), x.dtype),
                   jax.ShapeDtypeStruct((B, C, 1), x.dtype)),
        grid=(B,),
        in_specs=[
            pl.BlockSpec((1, C, T), lambda b: (b, 0, 0)),
            pl.BlockSpec((T, npool), lambda b: (0, 0)),
            pl.BlockSpec((C, 3), lambda b: (0, 0)),
        ],
        out_specs=(
            pl.BlockSpec((1, C, T), lambda b: (b, 0, 0)),
            pl.BlockSpec((1, C, 1), lambda b: (b, 0, 0)),
        ),
        compiler_params=pltpu.CompilerParams(
            dimension_semantics=("parallel",)),
    )(x, P, abg)
    return out, gate


def ssa_reference(x, alpha, gamma, beta):
    """Pure-JAX reference mirroring the PyTorch SSA forward (mode='var')."""
    B, C, T = x.shape
    npool = (T - POOL) // POOL + 1
    xc = x[:, :, :npool * POOL].reshape(B, C, npool, POOL)
    m = xc.mean(-1)
    ms = (xc * xc).mean(-1)
    var = ms - m * m
    gp = var.mean(-1, keepdims=True)                              # (B, C, 1)
    emb = jnp.sqrt(gp + EPS) * alpha
    norm = gamma / jnp.sqrt((emb * emb).mean(axis=1, keepdims=True) + EPS)
    gate = 1.0 + jnp.tanh(emb * norm + beta)
    return x * gate, gate


if __name__ == "__main__":
    B, C, T = 2, 64, 256   # T multiple of 128 (lane-dense), C multiple of 8

    key = jax.random.PRNGKey(0)
    ks = jax.random.split(key, 4)
    x = jax.random.normal(ks[0], (B, C, T), jnp.float32)
    # Non-trivial parameter values (init values 1/0/0 would make gate == 1).
    alpha = 1.0 + 0.1 * jax.random.normal(ks[1], (1, C, 1), jnp.float32)
    gamma = 0.5 * jax.random.normal(ks[2], (1, C, 1), jnp.float32)
    beta = 0.1 * jax.random.normal(ks[3], (1, C, 1), jnp.float32)

    out, gate = ssa_pallas(x, alpha, gamma, beta)
    out = jax.block_until_ready(out)
    gate = jax.block_until_ready(gate)

    ref_out, ref_gate = ssa_reference(x, alpha, gamma, beta)
    ref_out = jax.block_until_ready(ref_out)
    ref_gate = jax.block_until_ready(ref_gate)

    assert out.shape == ref_out.shape, (out.shape, ref_out.shape)
    assert gate.shape == ref_gate.shape, (gate.shape, ref_gate.shape)
    assert jnp.allclose(gate, ref_gate, rtol=1e-3, atol=1e-3), \
        f"gate max abs diff = {jnp.max(jnp.abs(gate - ref_gate))}"
    assert jnp.allclose(out, ref_out, rtol=1e-3, atol=1e-3), \
        f"out max abs diff = {jnp.max(jnp.abs(out - ref_out))}"
    print("KERNEL_OK")
</pallas_src>

<mosaic_0001>
module attributes {stable_mosaic.version = 11 : i64} {
  func.func @_ssa_kernel(%arg0: i32, %arg1: memref<1x64x256xf32, #tpu.memory_space<vmem>>, %arg2: memref<256x4xf32, #tpu.memory_space<vmem>>, %arg3: memref<64x3xf32, #tpu.memory_space<vmem>>, %arg4: memref<1x64x256xf32, #tpu.memory_space<vmem>>, %arg5: memref<1x64x1xf32, #tpu.memory_space<vmem>>) attributes {dimension_semantics = [#tpu.dimension_semantics<parallel>], iteration_bounds = array<i64: 2>, scalar_prefetch = 0 : i64, scratch_operands = 0 : i64, tpu.core_type = #tpu.core_type<tc>, window_params = [{transform_indices = @transform_0, window_bounds = array<i64: 1, 64, 256>}, {pipeline_mode = #tpu.pipeline_mode<synchronous>, transform_indices = @transform_1, window_bounds = array<i64: 256, 4>}, {pipeline_mode = #tpu.pipeline_mode<synchronous>, transform_indices = @transform_2, window_bounds = array<i64: 64, 3>}, {transform_indices = @transform_3, window_bounds = array<i64: 1, 64, 256>}, {transform_indices = @transform_4, window_bounds = array<i64: 1, 64, 1>}]} {
    %c0 = arith.constant 0 : index
    %c0_0 = arith.constant 0 : index
    %c0_1 = arith.constant 0 : index
    %0 = vector.load %arg1[%c0, %c0_0, %c0_1] : memref<1x64x256xf32, #tpu.memory_space<vmem>>, vector<1x64x256xf32>
    %1 = vector.shape_cast %0 : vector<1x64x256xf32> to vector<64x256xf32>
    %c0_2 = arith.constant 0 : index
    %c0_3 = arith.constant 0 : index
    %2 = vector.load %arg2[%c0_2, %c0_3] : memref<256x4xf32, #tpu.memory_space<vmem>>, vector<256x4xf32>
    %c0_4 = arith.constant 0 : index
    %c0_5 = arith.constant 0 : index
    %3 = vector.load %arg3[%c0_4, %c0_5] : memref<64x3xf32, #tpu.memory_space<vmem>>, vector<64x1xf32>
    %c0_6 = arith.constant 0 : index
    %c1 = arith.constant 1 : index
    %4 = vector.load %arg3[%c0_6, %c1] : memref<64x3xf32, #tpu.memory_space<vmem>>, vector<64x1xf32>
    %c0_7 = arith.constant 0 : index
    %c2 = arith.constant 2 : index
    %5 = vector.load %arg3[%c0_7, %c2] : memref<64x3xf32, #tpu.memory_space<vmem>>, vector<64x1xf32>
    %cst = arith.constant dense<0.000000e+00> : vector<64x4xf32>
    %6 = tpu.matmul %1, %2, %cst {dimension_numbers = #tpu.dot_dimension_numbers<[1], [0], [0], [1], [0, 0, 1, 1], [], []>} : vector<64x256xf32>, vector<256x4xf32>, vector<64x4xf32> -> vector<64x4xf32>
    %7 = arith.mulf %1, %1 : vector<64x256xf32>
    %cst_8 = arith.constant dense<0.000000e+00> : vector<64x4xf32>
    %8 = tpu.matmul %7, %2, %cst_8 {dimension_numbers = #tpu.dot_dimension_numbers<[1], [0], [0], [1], [0, 0, 1, 1], [], []>} : vector<64x256xf32>, vector<256x4xf32>, vector<64x4xf32> -> vector<64x4xf32>
    %9 = arith.mulf %6, %6 : vector<64x4xf32>
    %10 = arith.subf %8, %9 : vector<64x4xf32>
    %cst_9 = arith.constant dense<0.000000e+00> : vector<64xf32>
    %11 = vector.multi_reduction <add>, %10, %cst_9 [1] : vector<64x4xf32> to vector<64xf32>
    %12 = vector.shape_cast %11 : vector<64xf32> to vector<64x1xf32>
    %cst_10 = arith.constant 4.000000e+00 : f32
    %13 = vector.broadcast %cst_10 : f32 to vector<64x1xf32>
    %14 = arith.divf %12, %13 : vector<64x1xf32>
    %cst_11 = arith.constant 9.99999974E-6 : f32
    %15 = vector.broadcast %cst_11 : f32 to vector<64x1xf32>
    %16 = arith.addf %14, %15 : vector<64x1xf32>
    %17 = math.sqrt %16 : vector<64x1xf32>
    %18 = arith.mulf %17, %3 : vector<64x1xf32>
    %19 = arith.mulf %18, %18 : vector<64x1xf32>
    %cst_12 = arith.constant dense<0.000000e+00> : vector<1xf32>
    %20 = vector.multi_reduction <add>, %19, %cst_12 [0] : vector<64x1xf32> to vector<1xf32>
    %21 = vector.shape_cast %20 : vector<1xf32> to vector<1x1xf32>
    %cst_13 = arith.constant 6.400000e+01 : f32
    %22 = vector.broadcast %cst_13 : f32 to vector<1x1xf32>
    %23 = arith.divf %21, %22 : vector<1x1xf32>
    %cst_14 = arith.constant 9.99999974E-6 : f32
    %24 = vector.broadcast %cst_14 : f32 to vector<1x1xf32>
    %25 = arith.addf %23, %24 : vector<1x1xf32>
    %26 = math.rsqrt %25 : vector<1x1xf32>
    %27 = vector.broadcast %26 : vector<1x1xf32> to vector<64x1xf32>
    %28 = arith.mulf %4, %27 : vector<64x1xf32>
    %29 = arith.mulf %18, %28 : vector<64x1xf32>
    %30 = arith.addf %29, %5 : vector<64x1xf32>
    %31 = math.tanh %30 : vector<64x1xf32>
    %cst_15 = arith.constant 1.000000e+00 : f32
    %32 = vector.broadcast %cst_15 : f32 to vector<64x1xf32>
    %33 = arith.addf %32, %31 : vector<64x1xf32>
    %c0_16 = arith.constant 0 : index
    %c0_17 = arith.constant 0 : index
    %c0_18 = arith.constant 0 : index
    %34 = vector.load %arg5[%c0_16, %c0_17, %c0_18] : memref<1x64x1xf32, #tpu.memory_space<vmem>>, vector<1x64x1xf32>
    %35 = vector.shape_cast %34 : vector<1x64x1xf32> to vector<64x1xf32>
    %36 = vector.shape_cast %33 : vector<64x1xf32> to vector<1x64x1xf32>
    tpu.vector_store %arg5[%c0_16, %c0_17, %c0_18], %36 {strides = array<i32>} : memref<1x64x1xf32, #tpu.memory_space<vmem>>, vector<1x64x1xf32>,
    %37 = vector.broadcast %33 : vector<64x1xf32> to vector<64x256xf32>
    %38 = arith.mulf %1, %37 : vector<64x256xf32>
    %c0_19 = arith.constant 0 : index
    %c0_20 = arith.constant 0 : index
    %c0_21 = arith.constant 0 : index
    %39 = vector.load %arg4[%c0_19, %c0_20, %c0_21] : memref<1x64x256xf32, #tpu.memory_space<vmem>>, vector<1x64x256xf32>
    %40 = vector.shape_cast %39 : vector<1x64x256xf32> to vector<64x256xf32>
    %41 = vector.shape_cast %38 : vector<64x256xf32> to vector<1x64x256xf32>
    tpu.vector_store %arg4[%c0_19, %c0_20, %c0_21], %41 {strides = array<i32>} : memref<1x64x256xf32, #tpu.memory_space<vmem>>, vector<1x64x256xf32>,
    return
  }
  func.func @transform_0(%arg0: i32) -> (i32, i32, i32) {
    %c0_i32 = arith.constant 0 : i32
    %c0_i32_0 = arith.constant 0 : i32
    %c0_i32_1 = arith.constant 0 : i32
    return %arg0, %c0_i32, %c0_i32_0 : i32, i32, i32
  }
  func.func @transform_1(%arg0: i32) -> (i32, i32) {
    %c0_i32 = arith.constant 0 : i32
    %c0_i32_0 = arith.constant 0 : i32
    %c0_i32_1 = arith.constant 0 : i32
    return %c0_i32, %c0_i32_0 : i32, i32
  }
  func.func @transform_2(%arg0: i32) -> (i32, i32) {
    %c0_i32 = arith.constant 0 : i32
    %c0_i32_0 = arith.constant 0 : i32
    %c0_i32_1 = arith.constant 0 : i32
    return %c0_i32, %c0_i32_0 : i32, i32
  }
  func.func @transform_3(%arg0: i32) -> (i32, i32, i32) {
    %c0_i32 = arith.constant 0 : i32
    %c0_i32_0 = arith.constant 0 : i32
    %c0_i32_1 = arith.constant 0 : i32
    return %arg0, %c0_i32, %c0_i32_0 : i32, i32, i32
  }
  func.func @transform_4(%arg0: i32) -> (i32, i32, i32) {
    %c0_i32 = arith.constant 0 : i32
    %c0_i32_0 = arith.constant 0 : i32
    %c0_i32_1 = arith.constant 0 : i32
    return %arg0, %c0_i32, %c0_i32_0 : i32, i32, i32
  }
}

</mosaic_0001>

<llo_original>
// kernel: tpu_custom_call.1
$region0: #{tpu_custom_call.1}
  #allocation0 [shape = 'u32[]', space=smem, size = 0x4, offset = 0x4, fixed_abs, tag = 'smem constant byte address 0x4 - core index']
  #allocation1 [shape = 'u32[144,128]{1,0:T(1,128)}', space=vmem, size = 0x12000, scoped, tag = 'internal scratch']
  %s0 = inlined_call_operand.vmem [shape: f32[2,64,256], index: 0, kind: input, shape index: {}]
  %s1 = inlined_call_operand.vmem [shape: f32[256,4], index: 1, kind: input, shape index: {}]
  %s2 = inlined_call_operand.vmem [shape: f32[64,3], index: 2, kind: input, shape index: {}]
  %s3 = inlined_call_operand.hbm [shape: f32[2,64,256], index: 3, kind: output, shape index: {0}]
  %s4 = inlined_call_operand.vmem [shape: f32[2,64,1], index: 4, kind: output, shape index: {1}]
  %5 = xla_tuple %s3, %s4
  %s6 = sld [smem:[#allocation0]]
  $region53: #{tpu_custom_call.1} parent=0
    _
  %s8 = ssub.s32 1, %s6
  %s9 = scalar_select 0, %s8, %s6
  $region1: #{tpu_custom_call.1} parent=0
    #allocation2 [shape = 'u8[131072]{0}', space=vmem, size = 0x20000, scoped, tag = 'output window, operand 0']
    #allocation3 [shape = 's32[2]{0}', space=sflag, size = 0x8, scoped, tag = 'scoped memory for tpu_custom_call.1']
    %10 = vsyncpa [#allocation3], 0
    %s11 = scalar_lea.sflag [#allocation3], 1
    %12 = vsyncpa %s11, 0
    loop: start=0, step=1, limit=4
    $region2: #{tpu_custom_call.1} parent=1 // loop_pre_header
      _
    $region3: #{tpu_custom_call.1} parent=1 // loop_header
      %s14 = sphi 0, %s18
      %p15 = scmp.ge.s32.totalorder %s14, 4
      %s24 = sphi 0, %s26
      %s27 = sphi 0, %s24
      %s28 = sphi 0, %s27
      %s44 = sphi 0, %s28
      %s48 = sphi 0, %s48
      %s50 = sphi 0, %s48
      %s51 = sphi 0, %s50
      %s65 = sphi 0, %s51
      %s69 = sphi 0, %s69
      %s71 = sphi 0, %s69
      %s72 = sphi 0, %s71
      %s86 = sphi 0, %s72
      %s92 = sphi 0, %s94
      %s95 = sphi 0, %s92
      %s96 = sphi 0, %s95
      %s112 = sphi 0, %s96
      %s118 = sphi 0, %s120
      %s121 = sphi 0, %s118
      %s122 = sphi 0, %s121
      %s138 = sphi 0, %s122
    $region4: #{tpu_custom_call.1} parent=1 // loop_header_branch
      %17 = sbr.rel (%p15) target = $region8
    $region5: #{tpu_custom_call.1} parent=1 // loop_body
      %s19 = ssub.s32 %s14, 1
      %s20 = ssub.s32 %s14, 2
      %s21 = sadd.s32 %s14, 1
      %s22 = ssub.s32 %s14, %s21
      %p23 = scmp.eq.s32.totalorder %s22, 0
      %s25 = sadd.s32 %s24, 1
      %s26 = scalar_select %p23, %s24, %s25
      %p29 = pneg %p23
      %p30 = scmp.eq.s32.totalorder %s14, 1
      %p31 = por %p29, %p30
      %p32 = scmp.ne.s32.totalorder %s24, %s27
      %p33 = scmp.eq.s32.totalorder %s14, 0
      %p34 = por %p32, %p33
      %p35 = scmp.ne.s32.totalorder %s24, %s27
      %p36 = scmp.eq.s32.totalorder %s19, 1
      %p37 = por %p35, %p36
      %p38 = scmp.ne.s32.totalorder %s27, %s28
      %p39 = scmp.eq.s32.totalorder %s19, 0
      %p40 = por %p38, %p39
      %p41 = scmp.ne.s32.totalorder %s27, %s28
      %p42 = scmp.eq.s32.totalorder %s20, 1
      %p43 = por %p41, %p42
      %p45 = scmp.ne.s32.totalorder %s28, %s44
      %p46 = scmp.eq.s32.totalorder %s20, 0
      %p47 = por %p45, %p46
      %s49 = sadd.s32 %s48, 1
      %p52 = scmp.eq.s32.totalorder %s14, 1
      %p53 = scmp.ne.s32.totalorder %s48, %s50
      %p54 = scmp.eq.s32.totalorder %s14, 0
      %p55 = por %p53, %p54
      %p56 = scmp.ne.s32.totalorder %s48, %s50
      %p57 = scmp.eq.s32.totalorder %s19, 1
      %p58 = por %p56, %p57
      %p59 = scmp.ne.s32.totalorder %s50, %s51
      %p60 = scmp.eq.s32.totalorder %s19, 0
      %p61 = por %p59, %p60
      %p62 = scmp.ne.s32.totalorder %s50, %s51
      %p63 = scmp.eq.s32.totalorder %s20, 1
      %p64 = por %p62, %p63
      %p66 = scmp.ne.s32.totalorder %s51, %s65
      %p67 = scmp.eq.s32.totalorder %s20, 0
      %p68 = por %p66, %p67
      %s70 = sadd.s32 %s69, 1
      %p73 = scmp.eq.s32.totalorder %s14, 1
      %p74 = scmp.ne.s32.totalorder %s69, %s71
      %p75 = scmp.eq.s32.totalorder %s14, 0
      %p76 = por %p74, %p75
      %p77 = scmp.ne.s32.totalorder %s69, %s71
      %p78 = scmp.eq.s32.totalorder %s19, 1
      %p79 = por %p77, %p78
      %p80 = scmp.ne.s32.totalorder %s71, %s72
      %p81 = scmp.eq.s32.totalorder %s19, 0
      %p82 = por %p80, %p81
      %p83 = scmp.ne.s32.totalorder %s71, %s72
      %p84 = scmp.eq.s32.totalorder %s20, 1
      %p85 = por %p83, %p84
      %p87 = scmp.ne.s32.totalorder %s72, %s86
      %p88 = scmp.eq.s32.totalorder %s20, 0
      %p89 = por %p87, %p88
      %s90 = ssub.s32 %s14, %s21
      %p91 = scmp.eq.s32.totalorder %s90, 0
      %s93 = sadd.s32 %s92, 1
      %s94 = scalar_select %p91, %s92, %s93
      %p97 = pneg %p91
      %p98 = scmp.eq.s32.totalorder %s14, 1
      %p99 = por %p97, %p98
      %p100 = scmp.ne.s32.totalorder %s92, %s95
      %p101 = scmp.eq.s32.totalorder %s14, 0
      %p102 = por %p100, %p101
      %p103 = scmp.ne.s32.totalorder %s92, %s95
      %p104 = scmp.eq.s32.totalorder %s19, 1
      %p105 = por %p103, %p104
      %p106 = scmp.ne.s32.totalorder %s95, %s96
      %p107 = scmp.eq.s32.totalorder %s19, 0
      %p108 = por %p106, %p107
      %p109 = scmp.ne.s32.totalorder %s95, %s96
      %p110 = scmp.eq.s32.totalorder %s20, 1
      %p111 = por %p109, %p110
      %p113 = scmp.ne.s32.totalorder %s96, %s112
      %p114 = scmp.eq.s32.totalorder %s20, 0
      %p115 = por %p113, %p114
      %s116 = ssub.s32 %s14, %s21
      %p117 = scmp.eq.s32.totalorder %s116, 0
      %s119 = sadd.s32 %s118, 1
      %s120 = scalar_select %p117, %s118, %s119
      %p123 = pneg %p117
      %p124 = scmp.eq.s32.totalorder %s14, 1
      %p125 = por %p123, %p124
      %p126 = scmp.ne.s32.totalorder %s118, %s121
      %p127 = scmp.eq.s32.totalorder %s14, 0
      %p128 = por %p126, %p127
      %p129 = scmp.ne.s32.totalorder %s118, %s121
      %p130 = scmp.eq.s32.totalorder %s19, 1
      %p131 = por %p129, %p130
      %p132 = scmp.ne.s32.totalorder %s121, %s122
      %p133 = scmp.eq.s32.totalorder %s19, 0
      %p134 = por %p132, %p133
      %p135 = scmp.ne.s32.totalorder %s121, %s122
      %p136 = scmp.eq.s32.totalorder %s20, 1
      %p137 = por %p135, %p136
      %p139 = scmp.ne.s32.totalorder %s122, %s138
      %p140 = scmp.eq.s32.totalorder %s20, 0
      %p141 = por %p139, %p140
      %p142 = scmp.le.s32.totalorder 1, %s14
      %p143 = scmp.lt.s32.totalorder %s14, 3
      %p144 = pnand %p142, %p143
      %p145 = pneg %p144
      // Predicated region
      $region9: #{tpu_custom_call.1} parent=5 // pred_check
        _
      $region10: #{tpu_custom_call.1} parent=5 // pred_check_branch
        %147 = sbr.rel (%p144) target = $region12
      $region11: #{tpu_custom_call.1} parent=5 // pred_region
        %s148 = ssub.s32 %s14, 1
        // Predicated region
        $region13: #{tpu_custom_call.1} parent=11 // pred_check
          %p149 = pneg %p61
        $region14: #{tpu_custom_call.1} parent=11 // pred_check_branch
          %151 = sbr.rel (%p149) target = $region16
        $region15: #{tpu_custom_call.1} parent=11 // pred_region
          _
        $region16: #{tpu_custom_call.1} parent=11 // pred_fallthru
          _
        // Predicated region
        $region17: #{tpu_custom_call.1} parent=11 // pred_check
          %p152 = pneg %p82
        $region18: #{tpu_custom_call.1} parent=11 // pred_check_branch
          %154 = sbr.rel (%p152) target = $region20
        $region19: #{tpu_custom_call.1} parent=11 // pred_region
          _
        $region20: #{tpu_custom_call.1} parent=11 // pred_fallthru
          _
      $region12: #{tpu_custom_call.1} parent=5 // pred_fallthru
        _
      %p155 = scmp.lt.s32.totalorder %s14, 2
      // Predicated region
      $region21: #{tpu_custom_call.1} parent=5 // pred_check
        %p156 = pneg %p155
      $region22: #{tpu_custom_call.1} parent=5 // pred_check_branch
        %158 = sbr.rel (%p156) target = $region24
      $region23: #{tpu_custom_call.1} parent=5 // pred_region
        // Predicated region
        $region25: #{tpu_custom_call.1} parent=23 // pred_check
          %p159 = pneg %p34
        $region26: #{tpu_custom_call.1} parent=23 // pred_check_branch
          %161 = sbr.rel (%p159) target = $region28
        $region27: #{tpu_custom_call.1} parent=23 // pred_region
          %p162 = scmp.lt.s32.totalorder %s14, 1
          %s163 = scalar_select %p162, %s14, 1
          %s164 = smul.addr %s163, 16
          %s165 = smul.addr %s164, 8
          %s166 = scalar_lea.vmem %s0, %s165
        $region28: #{tpu_custom_call.1} parent=23 // pred_fallthru
          _
      $region24: #{tpu_custom_call.1} parent=5 // pred_fallthru
        _
      %p167 = scmp.le.s32.totalorder 1, %s14
      %p168 = scmp.lt.s32.totalorder %s14, 3
      %p169 = pnand %p167, %p168
      %p170 = pneg %p169
      // Predicated region
      $region29: #{tpu_custom_call.1} parent=5 // pred_check
        _
      $region30: #{tpu_custom_call.1} parent=5 // pred_check_branch
        %172 = sbr.rel (%p169) target = $region32
      $region31: #{tpu_custom_call.1} parent=5 // pred_region
        %s173 = ssub.s32 %s14, 1
        %p174 = scmp.lt.s32.totalorder %s19, 1
        %s175 = scalar_select %p174, %s19, 1
        %s176 = smul.addr %s175, 16
        %s177 = smul.addr %s176, 8
        %s178 = scalar_lea.vmem %s0, %s177
        %p179 = pneg %p40
        %p180 = pneg %p37
        %p181 = pneg %p61
        %p182 = pneg %p58
        %p183 = pneg %p82
        %p184 = pneg %p79
        %p185 = pneg %p108
        %p186 = pneg %p105
        %s187 = sand.u32 %s95, 1
        %s188 = scalar_lea.sflag [#allocation3], %s187
        %s189 = sand.u32 %s95, 1
        %s190 = smul.addr %s189, 128
        %s191 = scalar_lea.vmem [#allocation2], %s190
        %p192 = pneg %p134
        %p193 = pneg %p131
        %p194 = scmp.lt.s32.totalorder %s19, 1
        %s195 = scalar_select %p194, %s19, 1
        %s196 = smul.addr %s195, 8
        %s197 = smul.addr %s196, 8
        %s198 = scalar_lea.vmem %s4, %s197
        %p199 = scmp.lt.s32.totalorder %s19, 1
        %s200 = scalar_select %p199, %s19, 1
        %s201 = smul.addr %s200, 16
        %s202 = smul.addr %s201, 8
        %s203 = scalar_lea.vmem %s0, %s202
        %p204 = scmp.lt.s32.totalorder %s19, 1
        %s205 = scalar_select %p204, %s19, 1
        %s206 = smul.addr %s205, 8
        %s207 = smul.addr %s206, 8
        %s208 = scalar_lea.vmem %s4, %s207
        %v209 = vld [vmem:[%s203] sm:$0xff]
        %v210 = vld [vmem:[%s203 + $0x8] sm:$0xff]
        %v211 = vld [vmem:[%s203 + $0x10] sm:$0xff]
        %v212 = vld [vmem:[%s203 + $0x18] sm:$0xff]
        %v213 = vld [vmem:[%s203 + $0x20] sm:$0xff]
        %v214 = vld [vmem:[%s203 + $0x28] sm:$0xff]
        %v215 = vld [vmem:[%s203 + $0x30] sm:$0xff]
        %v216 = vld [vmem:[%s203 + $0x38] sm:$0xff]
        %v217 = vld [vmem:[%s203 + $0x40] sm:$0xff]
        %v218 = vld [vmem:[%s203 + $0x48] sm:$0xff]
        %v219 = vld [vmem:[%s203 + $0x50] sm:$0xff]
        %v220 = vld [vmem:[%s203 + $0x58] sm:$0xff]
        %v221 = vld [vmem:[%s203 + $0x60] sm:$0xff]
        %v222 = vld [vmem:[%s203 + $0x68] sm:$0xff]
        %v223 = vld [vmem:[%s203 + $0x70] sm:$0xff]
        %v224 = vld [vmem:[%s203 + $0x78] sm:$0xff]
        %v225 = vld [vmem:[%s1] sm:$0xff]
        %v226 = vld [vmem:[%s1 + $0x8] sm:$0xff]
        %v227 = vld [vmem:[%s1 + $0x10] sm:$0xff]
        %v228 = vld [vmem:[%s1 + $0x18] sm:$0xff]
        %v229 = vld [vmem:[%s1 + $0x20] sm:$0xff]
        %v230 = vld [vmem:[%s1 + $0x28] sm:$0xff]
        %v231 = vld [vmem:[%s1 + $0x30] sm:$0xff]
        %v232 = vld [vmem:[%s1 + $0x38] sm:$0xff]
        %v233 = vld [vmem:[%s1 + $0x40] sm:$0xff]
        %v234 = vld [vmem:[%s1 + $0x48] sm:$0xff]
        %v235 = vld [vmem:[%s1 + $0x50] sm:$0xff]
        %v236 = vld [vmem:[%s1 + $0x58] sm:$0xff]
        %v237 = vld [vmem:[%s1 + $0x60] sm:$0xff]
        %v238 = vld [vmem:[%s1 + $0x68] sm:$0xff]
        %v239 = vld [vmem:[%s1 + $0x70] sm:$0xff]
        %v240 = vld [vmem:[%s1 + $0x78] sm:$0xff]
        %v241 = vld [vmem:[%s1 + $0x80] sm:$0xff]
        %v242 = vld [vmem:[%s1 + $0x88] sm:$0xff]
        %v243 = vld [vmem:[%s1 + $0x90] sm:$0xff]
        %v244 = vld [vmem:[%s1 + $0x98] sm:$0xff]
        %v245 = vld [vmem:[%s1 + $0xa0] sm:$0xff]
        %v246 = vld [vmem:[%s1 + $0xa8] sm:$0xff]
        %v247 = vld [vmem:[%s1 + $0xb0] sm:$0xff]
        %v248 = vld [vmem:[%s1 + $0xb8] sm:$0xff]
        %v249 = vld [vmem:[%s1 + $0xc0] sm:$0xff]
        %v250 = vld [vmem:[%s1 + $0xc8] sm:$0xff]
        %v251 = vld [vmem:[%s1 + $0xd0] sm:$0xff]
        %v252 = vld [vmem:[%s1 + $0xd8] sm:$0xff]
        %v253 = vld [vmem:[%s1 + $0xe0] sm:$0xff]
        %v254 = vld [vmem:[%s1 + $0xe8] sm:$0xff]
        %v255 = vld [vmem:[%s1 + $0xf0] sm:$0xff]
        %v256 = vld [vmem:[%s1 + $0xf8] sm:$0xff]
        %v257 = vld [vmem:[%s2] sm:$0xff]
        %v258 = vld [vmem:[%s2 + $0x8] sm:$0xff]
        %v259 = vld [vmem:[%s2 + $0x10] sm:$0xff]
        %v260 = vld [vmem:[%s2 + $0x18] sm:$0xff]
        %v261 = vld [vmem:[%s2 + $0x20] sm:$0xff]
        %v262 = vld [vmem:[%s2 + $0x28] sm:$0xff]
        %v263 = vld [vmem:[%s2 + $0x30] sm:$0xff]
        %v264 = vld [vmem:[%s2 + $0x38] sm:$0xff]
        %265 = vmatprep.subr.mxu0 0.0
        %266 = vmatpush1.msra.mxu0 %v225
        %267 = vmatprep.subr.mxu0 0.0
        %268 = vmatpush1.msra.mxu0 %v226
        %269 = vmatprep.subr.mxu0 0.0
        %270 = vmatpush1.msra.mxu0 %v227
        %271 = vmatprep.subr.mxu0 0.0
        %272 = vmatpush1.msra.mxu0 %v228
        %273 = vmatprep.subr.mxu0 0.0
        %274 = vmatpush1.msra.mxu0 %v229
        %275 = vmatprep.subr.mxu0 0.0
        %276 = vmatpush1.msra.mxu0 %v230
        %277 = vmatprep.subr.mxu0 0.0
        %278 = vmatpush1.msra.mxu0 %v231
        %279 = vmatprep.subr.mxu0 0.0
        %280 = vmatpush1.msra.mxu0 %v232
        %281 = vmatprep.subr.mxu0 0.0
        %282 = vmatpush1.msra.mxu0 %v233
        %283 = vmatprep.subr.mxu0 0.0
        %284 = vmatpush1.msra.mxu0 %v234
        %285 = vmatprep.subr.mxu0 0.0
        %286 = vmatpush1.msra.mxu0 %v235
        %287 = vmatprep.subr.mxu0 0.0
        %288 = vmatpush1.msra.mxu0 %v236
        %289 = vmatprep.subr.mxu0 0.0
        %290 = vmatpush1.msra.mxu0 %v237
        %291 = vmatprep.subr.mxu0 0.0
        %292 = vmatpush1.msra.mxu0 %v238
        %293 = vmatprep.subr.mxu0 0.0
        %294 = vmatpush1.msra.mxu0 %v239
        %295 = vmatprep.subr.mxu0 0.0
        %296 = vmatpush1.msra.mxu0 %v240
        %297 = vmatprep.subr.mxu0 0.0
        %298 = vmatpush1.msra.mxu0 %v241
        %299 = vmatprep.subr.mxu0 0.0
        %300 = vmatpush1.msra.mxu0 %v242
        %301 = vmatprep.subr.mxu0 0.0
        %302 = vmatpush1.msra.mxu0 %v243
        %303 = vmatprep.subr.mxu0 0.0
        %304 = vmatpush1.msra.mxu0 %v244
        %305 = vmatprep.subr.mxu0 0.0
        %306 = vmatpush1.msra.mxu0 %v245
        %307 = vmatprep.subr.mxu0 0.0
        %308 = vmatpush1.msra.mxu0 %v246
        %309 = vmatprep.subr.mxu0 0.0
        %310 = vmatpush1.msra.mxu0 %v247
        %311 = vmatprep.subr.mxu0 0.0
        %312 = vmatpush1.msra.mxu0 %v248
        %313 = vmatprep.subr.mxu0 0.0
        %314 = vmatpush1.msra.mxu0 %v249
        %315 = vmatprep.subr.mxu0 0.0
        %316 = vmatpush1.msra.mxu0 %v250
        %317 = vmatprep.subr.mxu0 0.0
        %318 = vmatpush1.msra.mxu0 %v251
        %319 = vmatprep.subr.mxu0 0.0
        %320 = vmatpush1.msra.mxu0 %v252
        %321 = vmatprep.subr.mxu0 0.0
        %322 = vmatpush1.msra.mxu0 %v253
        %323 = vmatprep.subr.mxu0 0.0
        %324 = vmatpush1.msra.mxu0 %v254
        %325 = vmatprep.subr.mxu0 0.0
        %326 = vmatpush1.msra.mxu0 %v255
        %327 = vmatprep.subr.mxu0 0.0
        %328 = vmatpush1.msra.mxu0 %v256
        %329 = vmatprep.mubr.f32.mxu0 %v210
        %330 = vmatmul.mubr.f32.gmra.mrb[0].mxu0 %v209
        %v331 = vpop.f32.mrb[0].mxu0
        %v332 = vadd.f32 0.0, %v331
        %v333 = vpop.f32.mrb[0].mxu0
        %334 = vmatprep.mubr.f32.mxu0 %v212
        %335 = vmatmul.mubr.f32.gmra.mrb[0].mxu0 %v211
        %v336 = vpop.f32.mrb[0].mxu0
        %v337 = vadd.f32 0.0, %v336
        %v338 = vpop.f32.mrb[0].mxu0
        %339 = vmatprep.mubr.f32.mxu0 %v214
        %340 = vmatmul.mubr.f32.gmra.mrb[0].mxu0 %v213
        %v341 = vpop.f32.mrb[0].mxu0
        %v342 = vadd.f32 0.0, %v341
        %v343 = vpop.f32.mrb[0].mxu0
        %344 = vmatprep.mubr.f32.mxu0 %v216
        %345 = vmatmul.mubr.f32.gmra.mrb[0].mxu0 %v215
        %v346 = vpop.f32.mrb[0].mxu0
        %v347 = vadd.f32 0.0, %v346
        %v348 = vpop.f32.mrb[0].mxu0
        %349 = vmatprep.mubr.f32.mxu0 %v218
        %350 = vmatmul.mubr.f32.gmra.mrb[0].mxu0 %v217
        %v351 = vpop.f32.mrb[0].mxu0
        %v352 = vadd.f32 0.0, %v351
        %v353 = vpop.f32.mrb[0].mxu0
        %354 = vmatprep.mubr.f32.mxu0 %v220
        %355 = vmatmul.mubr.f32.gmra.mrb[0].mxu0 %v219
        %v356 = vpop.f32.mrb[0].mxu0
        %v357 = vadd.f32 0.0, %v356
        %v358 = vpop.f32.mrb[0].mxu0
        %359 = vmatprep.mubr.f32.mxu0 %v222
        %360 = vmatmul.mubr.f32.gmra.mrb[0].mxu0 %v221
        %v361 = vpop.f32.mrb[0].mxu0
        %v362 = vadd.f32 0.0, %v361
        %v363 = vpop.f32.mrb[0].mxu0
        %364 = vmatprep.mubr.f32.mxu0 %v224
        %365 = vmatmul.mubr.f32.gmra.mrb[0].mxu0 %v223
        %v366 = vpop.f32.mrb[0].mxu0
        %v367 = vadd.f32 0.0, %v366
        %v368 = vpop.f32.mrb[0].mxu0
        %369 = vdwg.mxu0
        %v370 = vmul.f32 %v209, %v209
        %v371 = vmul.f32 %v210, %v210
        %v372 = vmul.f32 %v211, %v211
        %v373 = vmul.f32 %v212, %v212
        %v374 = vmul.f32 %v213, %v213
        %v375 = vmul.f32 %v214, %v214
        %v376 = vmul.f32 %v215, %v215
        %v377 = vmul.f32 %v216, %v216
        %v378 = vmul.f32 %v217, %v217
        %v379 = vmul.f32 %v218, %v218
        %v380 = vmul.f32 %v219, %v219
        %v381 = vmul.f32 %v220, %v220
        %v382 = vmul.f32 %v221, %v221
        %v383 = vmul.f32 %v222, %v222
        %v384 = vmul.f32 %v223, %v223
        %v385 = vmul.f32 %v224, %v224
        %386 = vmatprep.subr.mxu0 0.0
        %387 = vmatpush1.msra.mxu0 %v225
        %388 = vmatprep.subr.mxu0 0.0
        %389 = vmatpush1.msra.mxu0 %v226
        %390 = vmatprep.subr.mxu0 0.0
        %391 = vmatpush1.msra.mxu0 %v227
        %392 = vmatprep.subr.mxu0 0.0
        %393 = vmatpush1.msra.mxu0 %v228
        %394 = vmatprep.subr.mxu0 0.0
        %395 = vmatpush1.msra.mxu0 %v229
        %396 = vmatprep.subr.mxu0 0.0
        %397 = vmatpush1.msra.mxu0 %v230
        %398 = vmatprep.subr.mxu0 0.0
        %399 = vmatpush1.msra.mxu0 %v231
        %400 = vmatprep.subr.mxu0 0.0
        %401 = vmatpush1.msra.mxu0 %v232
        %402 = vmatprep.subr.mxu0 0.0
        %403 = vmatpush1.msra.mxu0 %v233
        %404 = vmatprep.subr.mxu0 0.0
        %405 = vmatpush1.msra.mxu0 %v234
        %406 = vmatprep.subr.mxu0 0.0
        %407 = vmatpush1.msra.mxu0 %v235
        %408 = vmatprep.subr.mxu0 0.0
        %409 = vmatpush1.msra.mxu0 %v236
        %410 = vmatprep.subr.mxu0 0.0
        %411 = vmatpush1.msra.mxu0 %v237
        %412 = vmatprep.subr.mxu0 0.0
        %413 = vmatpush1.msra.mxu0 %v238
        %414 = vmatprep.subr.mxu0 0.0
        %415 = vmatpush1.msra.mxu0 %v239
        %416 = vmatprep.subr.mxu0 0.0
        %417 = vmatpush1.msra.mxu0 %v240
        %418 = vmatprep.subr.mxu0 0.0
        %419 = vmatpush1.msra.mxu0 %v241
        %420 = vmatprep.subr.mxu0 0.0
        %421 = vmatpush1.msra.mxu0 %v242
        %422 = vmatprep.subr.mxu0 0.0
        %423 = vmatpush1.msra.mxu0 %v243
        %424 = vmatprep.subr.mxu0 0.0
        %425 = vmatpush1.msra.mxu0 %v244
        %426 = vmatprep.subr.mxu0 0.0
        %427 = vmatpush1.msra.mxu0 %v245
        %428 = vmatprep.subr.mxu0 0.0
        %429 = vmatpush1.msra.mxu0 %v246
        %430 = vmatprep.subr.mxu0 0.0
        %431 = vmatpush1.msra.mxu0 %v247
        %432 = vmatprep.subr.mxu0 0.0
        %433 = vmatpush1.msra.mxu0 %v248
        %434 = vmatprep.subr.mxu0 0.0
        %435 = vmatpush1.msra.mxu0 %v249
        %436 = vmatprep.subr.mxu0 0.0
        %437 = vmatpush1.msra.mxu0 %v250
        %438 = vmatprep.subr.mxu0 0.0
        %439 = vmatpush1.msra.mxu0 %v251
        %440 = vmatprep.subr.mxu0 0.0
        %441 = vmatpush1.msra.mxu0 %v252
        %442 = vmatprep.subr.mxu0 0.0
        %443 = vmatpush1.msra.mxu0 %v253
        %444 = vmatprep.subr.mxu0 0.0
        %445 = vmatpush1.msra.mxu0 %v254
        %446 = vmatprep.subr.mxu0 0.0
        %447 = vmatpush1.msra.mxu0 %v255
        %448 = vmatprep.subr.mxu0 0.0
        %449 = vmatpush1.msra.mxu0 %v256
        %450 = vmatprep.mubr.f32.mxu0 %v371
        %451 = vmatmul.mubr.f32.gmra.mrb[0].mxu0 %v370
        %v452 = vpop.f32.mrb[0].mxu0
        %v453 = vadd.f32 0.0, %v452
        %v454 = vpop.f32.mrb[0].mxu0
        %455 = vmatprep.mubr.f32.mxu0 %v373
        %456 = vmatmul.mubr.f32.gmra.mrb[0].mxu0 %v372
        %v457 = vpop.f32.mrb[0].mxu0
        %v458 = vadd.f32 0.0, %v457
        %v459 = vpop.f32.mrb[0].mxu0
        %460 = vmatprep.mubr.f32.mxu0 %v375
        %461 = vmatmul.mubr.f32.gmra.mrb[0].mxu0 %v374
        %v462 = vpop.f32.mrb[0].mxu0
        %v463 = vadd.f32 0.0, %v462
        %v464 = vpop.f32.mrb[0].mxu0
        %465 = vmatprep.mubr.f32.mxu0 %v377
        %466 = vmatmul.mubr.f32.gmra.mrb[0].mxu0 %v376
        %v467 = vpop.f32.mrb[0].mxu0
        %v468 = vadd.f32 0.0, %v467
        %v469 = vpop.f32.mrb[0].mxu0
        %470 = vmatprep.mubr.f32.mxu0 %v379
        %471 = vmatmul.mubr.f32.gmra.mrb[0].mxu0 %v378
        %v472 = vpop.f32.mrb[0].mxu0
        %v473 = vadd.f32 0.0, %v472
        %v474 = vpop.f32.mrb[0].mxu0
        %475 = vmatprep.mubr.f32.mxu0 %v381
        %476 = vmatmul.mubr.f32.gmra.mrb[0].mxu0 %v380
        %v477 = vpop.f32.mrb[0].mxu0
        %v478 = vadd.f32 0.0, %v477
        %v479 = vpop.f32.mrb[0].mxu0
        %480 = vmatprep.mubr.f32.mxu0 %v383
        %481 = vmatmul.mubr.f32.gmra.mrb[0].mxu0 %v382
        %v482 = vpop.f32.mrb[0].mxu0
        %v483 = vadd.f32 0.0, %v482
        %v484 = vpop.f32.mrb[0].mxu0
        %485 = vmatprep.mubr.f32.mxu0 %v385
        %486 = vmatmul.mubr.f32.gmra.mrb[0].mxu0 %v384
        %v487 = vpop.f32.mrb[0].mxu0
        %v488 = vadd.f32 0.0, %v487
        %v489 = vpop.f32.mrb[0].mxu0
        %490 = vdwg.mxu0
        %v491 = vmul.f32 %v332, %v332
        %v492 = vmul.f32 %v337, %v337
        %v493 = vmul.f32 %v342, %v342
        %v494 = vmul.f32 %v347, %v347
        %v495 = vmul.f32 %v352, %v352
        %v496 = vmul.f32 %v357, %v357
        %v497 = vmul.f32 %v362, %v362
        %v498 = vmul.f32 %v367, %v367
        %v499 = vsub.f32 %v453, %v491
        %v500 = vsub.f32 %v458, %v492
        %v501 = vsub.f32 %v463, %v493
        %v502 = vsub.f32 %v468, %v494
        %v503 = vsub.f32 %v473, %v495
        %v504 = vsub.f32 %v478, %v496
        %v505 = vsub.f32 %v483, %v497
        %v506 = vsub.f32 %v488, %v498
        %vm507 = vcmask 31744
        %v508 = vsel %vm507, %v499, 0.0
        %509 = vadd.xlane.f32.xlu0 %v508
        %v510 = vpop.xlane.xlu0 %509
        %v511 = vsel %vm507, %v500, 0.0
        %512 = vadd.xlane.f32.xlu0 %v511
        %v513 = vpop.xlane.xlu0 %512
        %v514 = vsel %vm507, %v501, 0.0
        %515 = vadd.xlane.f32.xlu0 %v514
        %v516 = vpop.xlane.xlu0 %515
        %v517 = vsel %vm507, %v502, 0.0
        %518 = vadd.xlane.f32.xlu0 %v517
        %v519 = vpop.xlane.xlu0 %518
        %v520 = vsel %vm507, %v503, 0.0
        %521 = vadd.xlane.f32.xlu0 %v520
        %v522 = vpop.xlane.xlu0 %521
        %v523 = vsel %vm507, %v504, 0.0
        %524 = vadd.xlane.f32.xlu0 %v523
        %v525 = vpop.xlane.xlu0 %524
        %v526 = vsel %vm507, %v505, 0.0
        %527 = vadd.xlane.f32.xlu0 %v526
        %v528 = vpop.xlane.xlu0 %527
        %v529 = vsel %vm507, %v506, 0.0
        %530 = vadd.xlane.f32.xlu0 %v529
        %v531 = vpop.xlane.xlu0 %530
        %v532 = vrcp.pop 4.0
        %v533 = vmul.f32 %v510, %v532
        %v534 = vmul.f32 %v513, %v532
        %v535 = vmul.f32 %v516, %v532
        %v536 = vmul.f32 %v519, %v532
        %v537 = vmul.f32 %v522, %v532
        %v538 = vmul.f32 %v525, %v532
        %v539 = vmul.f32 %v528, %v532
        %v540 = vmul.f32 %v531, %v532
        %v541 = vadd.f32 %v533, 1e-05
        %v542 = vadd.f32 %v534, 1e-05
        %v543 = vadd.f32 %v535, 1e-05
        %v544 = vadd.f32 %v536, 1e-05
        %v545 = vadd.f32 %v537, 1e-05
        %v546 = vadd.f32 %v538, 1e-05
        %v547 = vadd.f32 %v539, 1e-05
        %v548 = vadd.f32 %v540, 1e-05
        %v549 = vrsqrt.pop %v541
        %v550 = vmul.f32 %v541, %v549
        %vm551 = vcmp.eq.f32.partialorder %v541, inf
        %v552 = vsel %vm551, %v541, %v550
        %vm553 = vcmp.eq.f32.partialorder %v541, 0.0
        %v554 = vand.u32 %v541, 2147483648
        %v555 = vsel %vm553, %v554, %v552
        %v556 = vrsqrt.pop %v542
        %v557 = vmul.f32 %v542, %v556
        %vm558 = vcmp.eq.f32.partialorder %v542, inf
        %v559 = vsel %vm558, %v542, %v557
        %vm560 = vcmp.eq.f32.partialorder %v542, 0.0
        %v561 = vand.u32 %v542, 2147483648
        %v562 = vsel %vm560, %v561, %v559
        %v563 = vrsqrt.pop %v543
        %v564 = vmul.f32 %v543, %v563
        %vm565 = vcmp.eq.f32.partialorder %v543, inf
        %v566 = vsel %vm565, %v543, %v564
        %vm567 = vcmp.eq.f32.partialorder %v543, 0.0
        %v568 = vand.u32 %v543, 2147483648
        %v569 = vsel %vm567, %v568, %v566
        %v570 = vrsqrt.pop %v544
        %v571 = vmul.f32 %v544, %v570
        %vm572 = vcmp.eq.f32.partialorder %v544, inf
        %v573 = vsel %vm572, %v544, %v571
        %vm574 = vcmp.eq.f32.partialorder %v544, 0.0
        %v575 = vand.u32 %v544, 2147483648
        %v576 = vsel %vm574, %v575, %v573
        %v577 = vrsqrt.pop %v545
        %v578 = vmul.f32 %v545, %v577
        %vm579 = vcmp.eq.f32.partialorder %v545, inf
        %v580 = vsel %vm579, %v545, %v578
        %vm581 = vcmp.eq.f32.partialorder %v545, 0.0
        %v582 = vand.u32 %v545, 2147483648
        %v583 = vsel %vm581, %v582, %v580
        %v584 = vrsqrt.pop %v546
        %v585 = vmul.f32 %v546, %v584
        %vm586 = vcmp.eq.f32.partialorder %v546, inf
        %v587 = vsel %vm586, %v546, %v585
        %vm588 = vcmp.eq.f32.partialorder %v546, 0.0
        %v589 = vand.u32 %v546, 2147483648
        %v590 = vsel %vm588, %v589, %v587
        %v591 = vrsqrt.pop %v547
        %v592 = vmul.f32 %v547, %v591
        %vm593 = vcmp.eq.f32.partialorder %v547, inf
        %v594 = vsel %vm593, %v547, %v592
        %vm595 = vcmp.eq.f32.partialorder %v547, 0.0
        %v596 = vand.u32 %v547, 2147483648
        %v597 = vsel %vm595, %v596, %v594
        %v598 = vrsqrt.pop %v548
        %v599 = vmul.f32 %v548, %v598
        %vm600 = vcmp.eq.f32.partialorder %v548, inf
        %v601 = vsel %vm600, %v548, %v599
        %vm602 = vcmp.eq.f32.partialorder %v548, 0.0
        %v603 = vand.u32 %v548, 2147483648
        %v604 = vsel %vm602, %v603, %v601
        %v605 = vmul.f32 %v555, %v257
        %v606 = vmul.f32 %v562, %v258
        %v607 = vmul.f32 %v569, %v259
        %v608 = vmul.f32 %v576, %v260
        %v609 = vmul.f32 %v583, %v261
        %v610 = vmul.f32 %v590, %v262
        %v611 = vmul.f32 %v597, %v263
        %v612 = vmul.f32 %v604, %v264
        %v613 = vmul.f32 %v605, %v605
        %v614 = vmul.f32 %v606, %v606
        %v615 = vmul.f32 %v607, %v607
        %v616 = vmul.f32 %v608, %v608
        %v617 = vmul.f32 %v609, %v609
        %v618 = vmul.f32 %v610, %v610
        %v619 = vmul.f32 %v611, %v611
        %v620 = vmul.f32 %v612, %v612
        %vm621 = vcmask 7168
        %v622 = vsel %vm621, %v613, 0.0
        %v623 = vsel %vm621, %v614, 0.0
        %v624 = vadd.f32 %v622, %v623
        %v625 = vsel %vm621, %v615, 0.0
        %v626 = vadd.f32 %v624, %v625
        %v627 = vsel %vm621, %v616, 0.0
        %v628 = vadd.f32 %v626, %v627
        %v629 = vsel %vm621, %v617, 0.0
        %v630 = vadd.f32 %v628, %v629
        %v631 = vsel %vm621, %v618, 0.0
        %v632 = vadd.f32 %v630, %v631
        %v633 = vsel %vm621, %v619, 0.0
        %v634 = vadd.f32 %v632, %v633
        %v635 = vsel %vm621, %v620, 0.0
        %v636 = vadd.f32 %v634, %v635
        %v637 = vrot.slane %v636, 4
        %v638 = vadd.f32 %v636, %v637
        %v639 = vrot.slane %v638, 2
        %v640 = vadd.f32 %v638, %v639
        %v641 = vrot.slane %v640, 1
        %v642 = vadd.f32 %v640, %v641
        %v643 = vrcp.pop 64.0
        %v644 = vmul.f32 %v642, %v643
        %v645 = vadd.f32 %v644, 1e-05
        %v646 = vrsqrt.pop %v645
        %648 = vrot.lane.b32.xlu0 %v646, 1
        %v649 = vpop.permute.xlu0 %648
        %v651 = vmul.f32 %v257, %v649
        %v652 = vmul.f32 %v258, %v649
        %v653 = vmul.f32 %v259, %v649
        %v654 = vmul.f32 %v260, %v649
        %v655 = vmul.f32 %v261, %v649
        %v656 = vmul.f32 %v262, %v649
        %v657 = vmul.f32 %v263, %v649
        %v658 = vmul.f32 %v264, %v649
        %667 = vrot.lane.b32.xlu0 %v651, 127
        %v668 = vpop.permute.xlu0 %667
        %669 = vrot.lane.b32.xlu0 %v652, 127
        %v670 = vpop.permute.xlu0 %669
        %671 = vrot.lane.b32.xlu0 %v653, 127
        %v672 = vpop.permute.xlu0 %671
        %673 = vrot.lane.b32.xlu0 %v654, 127
        %v674 = vpop.permute.xlu0 %673
        %675 = vrot.lane.b32.xlu0 %v655, 127
        %v676 = vpop.permute.xlu0 %675
        %677 = vrot.lane.b32.xlu0 %v656, 127
        %v678 = vpop.permute.xlu0 %677
        %679 = vrot.lane.b32.xlu0 %v657, 127
        %v680 = vpop.permute.xlu0 %679
        %681 = vrot.lane.b32.xlu0 %v658, 127
        %v682 = vpop.permute.xlu0 %681
        %v691 = vmul.f32 %v605, %v668
        %v692 = vmul.f32 %v606, %v670
        %v693 = vmul.f32 %v607, %v672
        %v694 = vmul.f32 %v608, %v674
        %v695 = vmul.f32 %v609, %v676
        %v696 = vmul.f32 %v610, %v678
        %v697 = vmul.f32 %v611, %v680
        %v698 = vmul.f32 %v612, %v682
        %707 = vrot.lane.b32.xlu0 %v257, 126
        %v708 = vpop.permute.xlu0 %707
        %709 = vrot.lane.b32.xlu0 %v258, 126
        %v710 = vpop.permute.xlu0 %709
        %711 = vrot.lane.b32.xlu0 %v259, 126
        %v712 = vpop.permute.xlu0 %711
        %713 = vrot.lane.b32.xlu0 %v260, 126
        %v714 = vpop.permute.xlu0 %713
        %715 = vrot.lane.b32.xlu0 %v261, 126
        %v716 = vpop.permute.xlu0 %715
        %717 = vrot.lane.b32.xlu0 %v262, 126
        %v718 = vpop.permute.xlu0 %717
        %719 = vrot.lane.b32.xlu0 %v263, 126
        %v720 = vpop.permute.xlu0 %719
        %721 = vrot.lane.b32.xlu0 %v264, 126
        %v722 = vpop.permute.xlu0 %721
        %v731 = vadd.f32 %v691, %v708
        %v732 = vadd.f32 %v692, %v710
        %v733 = vadd.f32 %v693, %v712
        %v734 = vadd.f32 %v694, %v714
        %v735 = vadd.f32 %v695, %v716
        %v736 = vadd.f32 %v696, %v718
        %v737 = vadd.f32 %v697, %v720
        %v738 = vadd.f32 %v698, %v722
        %v739 = vtanh.pop %v731
        %v740 = vtanh.pop %v732
        %v741 = vtanh.pop %v733
        %v742 = vtanh.pop %v734
        %v743 = vtanh.pop %v735
        %v744 = vtanh.pop %v736
        %v745 = vtanh.pop %v737
        %v746 = vtanh.pop %v738
        %v747 = vadd.f32 %v739, 1.0
        %v748 = vadd.f32 %v740, 1.0
        %v749 = vadd.f32 %v741, 1.0
        %v750 = vadd.f32 %v742, 1.0
        %v751 = vadd.f32 %v743, 1.0
        %v752 = vadd.f32 %v744, 1.0
        %v753 = vadd.f32 %v745, 1.0
        %v754 = vadd.f32 %v746, 1.0
        %755 = vst.msk [vmem:[%s208] sm:$0xff] %vm621, %v747
        %756 = vst.msk [vmem:[%s208 + $0x8] sm:$0xff] %vm621, %v748
        %757 = vst.msk [vmem:[%s208 + $0x10] sm:$0xff] %vm621, %v749
        %758 = vst.msk [vmem:[%s208 + $0x18] sm:$0xff] %vm621, %v750
        %759 = vst.msk [vmem:[%s208 + $0x20] sm:$0xff] %vm621, %v751
        %760 = vst.msk [vmem:[%s208 + $0x28] sm:$0xff] %vm621, %v752
        %761 = vst.msk [vmem:[%s208 + $0x30] sm:$0xff] %vm621, %v753
        %762 = vst.msk [vmem:[%s208 + $0x38] sm:$0xff] %vm621, %v754
        %764 = vset.pattern.permute.xlu0 0
        %765 = vperm.xlu0 %764, %v747
        %v766 = vpop.permute.xlu0 %765
        %769 = vset.pattern.permute.xlu0 0
        %770 = vperm.xlu0 %769, %v748
        %v771 = vpop.permute.xlu0 %770
        %774 = vset.pattern.permute.xlu0 0
        %775 = vperm.xlu0 %774, %v749
        %v776 = vpop.permute.xlu0 %775
        %779 = vset.pattern.permute.xlu0 0
        %780 = vperm.xlu0 %779, %v750
        %v781 = vpop.permute.xlu0 %780
        %784 = vset.pattern.permute.xlu0 0
        %785 = vperm.xlu0 %784, %v751
        %v786 = vpop.permute.xlu0 %785
        %789 = vset.pattern.permute.xlu0 0
        %790 = vperm.xlu0 %789, %v752
        %v791 = vpop.permute.xlu0 %790
        %794 = vset.pattern.permute.xlu0 0
        %795 = vperm.xlu0 %794, %v753
        %v796 = vpop.permute.xlu0 %795
        %799 = vset.pattern.permute.xlu0 0
        %800 = vperm.xlu0 %799, %v754
        %v801 = vpop.permute.xlu0 %800
        %v803 = vmul.f32 %v209, %v766
        %v804 = vmul.f32 %v210, %v766
        %v805 = vmul.f32 %v211, %v771
        %v806 = vmul.f32 %v212, %v771
        %v807 = vmul.f32 %v213, %v776
        %v808 = vmul.f32 %v214, %v776
        %v809 = vmul.f32 %v215, %v781
        %v810 = vmul.f32 %v216, %v781
        %v811 = vmul.f32 %v217, %v786
        %v812 = vmul.f32 %v218, %v786
        %v813 = vmul.f32 %v219, %v791
        %v814 = vmul.f32 %v220, %v791
        %v815 = vmul.f32 %v221, %v796
        %v816 = vmul.f32 %v222, %v796
        %v817 = vmul.f32 %v223, %v801
        %v818 = vmul.f32 %v224, %v801
        %819 = vst [vmem:[%s191] sm:$0xff] %v803
        %820 = vst [vmem:[%s191 + $0x8] sm:$0xff] %v804
        %821 = vst [vmem:[%s191 + $0x10] sm:$0xff] %v805
        %822 = vst [vmem:[%s191 + $0x18] sm:$0xff] %v806
        %823 = vst [vmem:[%s191 + $0x20] sm:$0xff] %v807
        %824 = vst [vmem:[%s191 + $0x28] sm:$0xff] %v808
        %825 = vst [vmem:[%s191 + $0x30] sm:$0xff] %v809
        %826 = vst [vmem:[%s191 + $0x38] sm:$0xff] %v810
        %827 = vst [vmem:[%s191 + $0x40] sm:$0xff] %v811
        %828 = vst [vmem:[%s191 + $0x48] sm:$0xff] %v812
        %829 = vst [vmem:[%s191 + $0x50] sm:$0xff] %v813
        %830 = vst [vmem:[%s191 + $0x58] sm:$0xff] %v814
        %831 = vst [vmem:[%s191 + $0x60] sm:$0xff] %v815
        %832 = vst [vmem:[%s191 + $0x68] sm:$0xff] %v816
        %833 = vst [vmem:[%s191 + $0x70] sm:$0xff] %v817
        %834 = vst [vmem:[%s191 + $0x78] sm:$0xff] %v818
        %s835 = sand.u32 %s95, 1
        %s836 = scalar_lea.sflag [#allocation3], %s835
        %s837 = sand.u32 %s95, 1
        %s838 = smul.addr %s837, 128
        %s839 = scalar_lea.vmem [#allocation2], %s838
        %p840 = scmp.lt.s32.totalorder %s19, 1
        %s841 = scalar_select %p840, %s19, 1
        %s842 = smul.addr %s841, 8
        %s843 = smul.addr %s842, 8
        %s844 = scalar_lea.vmem %s4, %s843
        // Predicated region
        $region33: #{tpu_custom_call.1} parent=31 // pred_check
          %p845 = pneg %p105
        $region34: #{tpu_custom_call.1} parent=31 // pred_check_branch
          %847 = sbr.rel (%p845) target = $region36
        $region35: #{tpu_custom_call.1} parent=31 // pred_region
          %s849 = ssub.s32 2048, 2048
          %850 = vsyncadd %s836, %s849
          %s851 = smul.addr %s19, 16
          %s852 = smul.addr %s851, 128
          %s853 = scalar_lea.hbm %s3, %s852
          %s854 = sshll.u32 %s839, 4
          %s855 = int_to_ptr.vmem [resolvable:$true] %s854
          %860 = dma.vmem_to_hbm [thread:$0]  %s855, 2048, %s853, %s836, 256, 256, 16
        $region36: #{tpu_custom_call.1} parent=31 // pred_fallthru
          _
        // Predicated region
        $region37: #{tpu_custom_call.1} parent=31 // pred_check
          %p861 = pneg %p131
        $region38: #{tpu_custom_call.1} parent=31 // pred_check_branch
          %863 = sbr.rel (%p861) target = $region40
        $region39: #{tpu_custom_call.1} parent=31 // pred_region
          _
        $region40: #{tpu_custom_call.1} parent=31 // pred_fallthru
          _
      $region32: #{tpu_custom_call.1} parent=5 // pred_fallthru
        _
      %p864 = scmp.le.s32.totalorder 2, %s14
      // Predicated region
      $region41: #{tpu_custom_call.1} parent=5 // pred_check
        %p865 = pneg %p864
      $region42: #{tpu_custom_call.1} parent=5 // pred_check_branch
        %867 = sbr.rel (%p865) target = $region44
      $region43: #{tpu_custom_call.1} parent=5 // pred_region
        %s868 = ssub.s32 %s14, 2
        // Predicated region
        $region45: #{tpu_custom_call.1} parent=43 // pred_check
          %p869 = pneg %p111
        $region46: #{tpu_custom_call.1} parent=43 // pred_check_branch
          %871 = sbr.rel (%p869) target = $region48
        $region47: #{tpu_custom_call.1} parent=43 // pred_region
          %s872 = sand.u32 %s96, 1
          %s873 = scalar_lea.sflag [#allocation3], %s872
          %s874 = sand.u32 %s96, 1
          %s875 = smul.addr %s874, 128
          %s876 = scalar_lea.vmem [#allocation2], %s875
          %877 = dma.done %s873, 2048
        $region48: #{tpu_custom_call.1} parent=43 // pred_fallthru
          _
        // Predicated region
        $region49: #{tpu_custom_call.1} parent=43 // pred_check
          %p878 = pneg %p137
        $region50: #{tpu_custom_call.1} parent=43 // pred_check_branch
          %880 = sbr.rel (%p878) target = $region52
        $region51: #{tpu_custom_call.1} parent=43 // pred_region
          %p881 = scmp.lt.s32.totalorder %s20, 1
          %s882 = scalar_select %p881, %s20, 1
          %s883 = smul.addr %s882, 8
          %s884 = smul.addr %s883, 8
          %s885 = scalar_lea.vmem %s4, %s884
        $region52: #{tpu_custom_call.1} parent=43 // pred_fallthru
          _
      $region44: #{tpu_custom_call.1} parent=5 // pred_fallthru
        _
    $region6: #{tpu_custom_call.1} parent=1 // loop_footer
      %s18 = sadd.s32 1, %s14
    $region7: #{tpu_custom_call.1} parent=1 // loop_footer_branch
      %13 = sbr.rel target = $region3
    $region8: #{tpu_custom_call.1} parent=1 // loop_exit
      _
    %886 = vsyncpa [#allocation3], 1
    %s887 = scalar_lea.sflag [#allocation3], 1
    %888 = vsyncpa %s887, 1

</llo_original>
